<compile_context>
chip_gen: v6e
topology: v6e:2x2x1
jax: 0.10.0
libtpu: 0.0.40
codegen_flags: <defaults>
</compile_context>

<pallas_src>
import jax
import jax.numpy as jnp
from jax.experimental import pallas as pl
from jax.experimental.pallas import tpu as pltpu

# ----- small, module-consistent sizes -------------------------------------
EMBED_SIZE = 16
HIDDEN_SIZE = 32
TARGET_SIZE = 12
T_K = 8
BATCH = 2


# ----------------------------- Pallas kernel ------------------------------
def decoder_kernel(tok_ref, emb_ref, hx_ref, cx_ref, enc_ref,
                   w_lstm_ref, w_att_ref,
                   final_ref, hx_out_ref, cx_out_ref):
    H, E, B, T, V = HIDDEN_SIZE, EMBED_SIZE, BATCH, T_K, TARGET_SIZE
    BT = B * T
    f32 = jnp.float32

    # ---- embedding gather: exact one-hot matmul against the tiny VMEM table
    iota_v = jax.lax.broadcasted_iota(jnp.int32, (1, V), 1)
    onehot = jnp.concatenate(
        [(iota_v == tok_ref[i]).astype(f32) for i in range(B)], axis=0)   # (B, V)
    embed = jnp.dot(onehot, emb_ref[...], preferred_element_type=f32)     # (B, E)

    hx = hx_ref[...]                                                      # (B, H)
    cx = cx_ref[...]                                                      # (B, H)

    # ---- LSTMCell: gates = embed @ Wih^T + hx @ Whh^T + (b_ih + b_hh) -----
    gates = (
        jnp.dot(embed, w_lstm_ref[0:E, :], preferred_element_type=f32)
        + jnp.dot(hx, w_lstm_ref[E:E + H, :], preferred_element_type=f32)
        + w_lstm_ref[E + H:E + H + 1, :]                                  # bias row
    )                                                   # (B, 4H), order i, f, g, o
    i_g = jax.nn.sigmoid(gates[:, 0:H])
    f_g = jax.nn.sigmoid(gates[:, H:2 * H])
    g_g = jnp.tanh(gates[:, 2 * H:3 * H])
    o_g = jax.nn.sigmoid(gates[:, 3 * H:4 * H])
    cx_new = f_g * cx + i_g * g_g
    hx_new = o_g * jnp.tanh(cx_new)                                       # (B, H)

    # ---- attention — static lane slices of the lane-packed constant slab ---
    lin_wT_a = w_att_ref[0:H, 0:H]            # (H, H)  lin_w^T rows for `content`
    lin_wT_b = w_att_ref[H:2 * H, 0:H]        # (H, H)  lin_w^T rows for `hx`
    ws_wT = w_att_ref[0:H, H:2 * H]           # (H, H)
    ws_b = w_att_ref[H:H + 1, H:2 * H]        # (1, H)
    lin_b = w_att_ref[H + 1:H + 2, H:2 * H]   # (1, H)
    v_col = w_att_ref[0:H, 2 * H:2 * H + 1]   # (H, 1)
    bcast = w_att_ref[0:BT, 2 * H + 1:2 * H + 1 + B]          # (BT, B) one-hot
    pool = w_att_ref[0:B, 2 * H + 1 + B:2 * H + 1 + B + BT]   # (B, BT) one-hot

    # lane-packed encoder slab; row r -> (batch r // T, time r % T)
    enc_feat = enc_ref[:, 0:H]                # (BT, H)
    enc_out = enc_ref[:, H:2 * H]             # (BT, H)
    mask = enc_ref[:, 2 * H:2 * H + 1]        # (BT, 1)

    dec_feat = jnp.dot(hx_new, ws_wT, preferred_element_type=f32) + ws_b  # (B, H)
    dec_rep = jnp.dot(bcast, dec_feat, preferred_element_type=f32)        # (BT, H)

    e = jnp.tanh(enc_feat + dec_rep)                                      # (BT, H)
    # v-bias and max-subtraction omitted: both cancel exactly in the softmax
    # ratio; |scores| <= ||v||_1 because e in [-1, 1], so exp cannot overflow.
    scores = jnp.dot(e, v_col, preferred_element_type=f32)                # (BT, 1)
    ex = jnp.exp(scores)                                                  # (BT, 1)
    weighted = (ex * mask) * enc_out                                      # (BT, H)

    # per-batch time sums as matmuls with the constant pooling selector
    content = (jnp.dot(pool, weighted, preferred_element_type=f32)
               / jnp.dot(pool, ex, preferred_element_type=f32))           # (B, H)

    # final projection; lin_w^T is split so no in-kernel lane concat is needed
    final = jnp.tanh(
        jnp.dot(content, lin_wT_a, preferred_element_type=f32)
        + jnp.dot(hx_new, lin_wT_b, preferred_element_type=f32)
        + lin_b)                                                          # (B, H)

    final_ref[...] = final
    hx_out_ref[...] = hx_new
    cx_out_ref[...] = cx_new


# ------------------------ host-side parameter packing ----------------------
def pack_decoder_params(params):
    """Pre-transpose + lane-pack all weights into two VMEM-friendly slabs."""
    H, E, B, T = HIDDEN_SIZE, EMBED_SIZE, BATCH, T_K
    BT = B * T
    f32 = jnp.float32

    b_lstm = (params["b_ih"] + params["b_hh"]).reshape(1, 4 * H)
    w_lstm_slab = jnp.concatenate(
        [params["w_ih"].T, params["w_hh"].T, b_lstm], axis=0
    ).astype(f32)                                   # (E+H+1, 4H) -- lane-dense

    # lane-packed attention / projection / constant slab (2H, 96):
    #   [0:2H, 0:H]                 lin_w^T (content rows, then hx rows)
    #   [0:H,  H:2H]                ws_w^T
    #   [H,    H:2H]                ws_b
    #   [H+1,  H:2H]                lin_b
    #   [0:H,  2H]                  v^T column
    #   [0:BT, 2H+1 : 2H+1+B]       bcast one-hot (row r -> batch r // T)
    #   [0:B,  2H+1+B : 2H+1+B+BT]  pool one-hot (its transpose)
    bcast = (jnp.arange(BT)[:, None] // T == jnp.arange(B)[None, :]).astype(f32)
    slab = jnp.zeros((2 * H, 96), f32)
    slab = slab.at[0:2 * H, 0:H].set(params["lin_w"].T.astype(f32))
    slab = slab.at[0:H, H:2 * H].set(params["ws_w"].T.astype(f32))
    slab = slab.at[H, H:2 * H].set(params["ws_b"].astype(f32))
    slab = slab.at[H + 1, H:2 * H].set(params["lin_b"].astype(f32))
    slab = slab.at[0:H, 2 * H].set(params["v_w"][0].astype(f32))
    slab = slab.at[0:BT, 2 * H + 1:2 * H + 1 + B].set(bcast)
    slab = slab.at[0:B, 2 * H + 1 + B:2 * H + 1 + B + BT].set(bcast.T)
    # NOTE: v_b is intentionally not packed (cancels exactly in the softmax).

    return {
        "embedding": params["embedding"].astype(f32),
        "w_lstm_slab": w_lstm_slab,
        "w_att_slab": slab,
    }


def pack_encoder_inputs(encoder_outputs, encoder_features, mask_tensor):
    """Lane-packed, batch-major encoder slab (B*T, 2H+1). Loop-invariant —
    build it once per source sequence, outside any decode loop."""
    H, B, T = HIDDEN_SIZE, BATCH, T_K
    BT = B * T
    f32 = jnp.float32
    ef = jnp.transpose(encoder_features, (1, 0, 2)).reshape(BT, H).astype(f32)
    eo = jnp.transpose(encoder_outputs, (1, 0, 2)).reshape(BT, H).astype(f32)
    mk = jnp.transpose(mask_tensor, (1, 0, 2)).reshape(BT, 1).astype(f32)
    return jnp.concatenate([ef, eo, mk], axis=1)    # (BT, 2H+1) = (16, 65)


# ------------------------------- wrapper -----------------------------------
@jax.jit
def decoder_forward(t_input, hx, cx, enc_slab, packed):
    H, B = HIDDEN_SIZE, BATCH
    f32 = jnp.float32
    vmem = pl.BlockSpec(memory_space=pltpu.MemorySpace.VMEM)
    smem = pl.BlockSpec(memory_space=pltpu.MemorySpace.SMEM)

    final, hx_new, cx_new = pl.pallas_call(
        decoder_kernel,
        out_shape=(
            jax.ShapeDtypeStruct((B, H), f32),
            jax.ShapeDtypeStruct((B, H), f32),
            jax.ShapeDtypeStruct((B, H), f32),
        ),
        in_specs=[smem, vmem, vmem, vmem, vmem, vmem, vmem],
        out_specs=(vmem, vmem, vmem),
    )(t_input.astype(jnp.int32), packed["embedding"],
      hx.astype(f32), cx.astype(f32), enc_slab,
      packed["w_lstm_slab"], packed["w_att_slab"])
    return final, hx_new, cx_new


# ------------------------- reference (plain JAX) ----------------------------
def decoder_reference(t_input, hx, cx, enc_out, enc_feat, mask, params):
    H = HIDDEN_SIZE
    embed = params["embedding"][t_input]
    gates = (embed @ params["w_ih"].T + params["b_ih"]
             + hx @ params["w_hh"].T + params["b_hh"])
    i_g = jax.nn.sigmoid(gates[:, :H])
    f_g = jax.nn.sigmoid(gates[:, H:2 * H])
    g_g = jnp.tanh(gates[:, 2 * H:3 * H])
    o_g = jax.nn.sigmoid(gates[:, 3 * H:])
    cx_n = f_g * cx + i_g * g_g
    hx_n = o_g * jnp.tanh(cx_n)
    dec_feat = hx_n @ params["ws_w"].T + params["ws_b"]
    e = jnp.tanh(enc_feat + dec_feat[None])
    scores = e @ params["v_w"].T + params["v_b"]                  # (t_k, b, 1)
    align = jax.nn.softmax(scores, axis=0) * mask
    content = jnp.sum(align * enc_out, axis=0)
    final = jnp.tanh(
        jnp.concatenate([content, hx_n], axis=1) @ params["lin_w"].T
        + params["lin_b"])
    return final, hx_n, cx_n


# ------------------------------- main ---------------------------------------
if __name__ == "__main__":
    key = jax.random.PRNGKey(0)
    keys = jax.random.split(key, 18)
    H, E, V = HIDDEN_SIZE, EMBED_SIZE, TARGET_SIZE
    s = 0.1

    # Deterministic parameter init (PyTorch module shapes).
    embedding = jax.random.normal(keys[0], (V, E), jnp.float32) * s
    embedding = embedding.at[0].set(0.0)                          # padding_idx=0

    params = {
        "embedding": embedding,
        "w_ih": jax.random.normal(keys[1], (4 * H, E), jnp.float32) * s,
        "w_hh": jax.random.normal(keys[2], (4 * H, H), jnp.float32) * s,
        "b_ih": jax.random.normal(keys[3], (4 * H,), jnp.float32) * s,
        "b_hh": jax.random.normal(keys[4], (4 * H,), jnp.float32) * s,
        "ws_w": jax.random.normal(keys[5], (H, H), jnp.float32) * s,
        "ws_b": jax.random.normal(keys[6], (H,), jnp.float32) * s,
        "v_w": jax.random.normal(keys[7], (1, H), jnp.float32) * s,
        "v_b": jax.random.normal(keys[8], (1,), jnp.float32) * s,
        "lin_w": jax.random.normal(keys[9], (H, 2 * H), jnp.float32) * s,
        "lin_b": jax.random.normal(keys[10], (H,), jnp.float32) * s,
    }
    packed = pack_decoder_params(params)

    # Example inputs.
    t_input = jax.random.randint(keys[11], (BATCH,), 0, V)
    hx0 = jax.random.normal(keys[12], (BATCH, H), jnp.float32)
    cx0 = jax.random.normal(keys[13], (BATCH, H), jnp.float32)
    enc_out = jax.random.normal(keys[14], (T_K, BATCH, H), jnp.float32)
    enc_feat = jax.random.normal(keys[15], (T_K, BATCH, H), jnp.float32)
    mask = (jax.random.uniform(keys[16], (T_K, BATCH, 1)) > 0.2).astype(jnp.float32)

    # Loop-invariant packing done once (outside any decode loop).
    enc_slab = pack_encoder_inputs(enc_out, enc_feat, mask)

    final_dist, hx1, cx1 = decoder_forward(t_input, hx0, cx0, enc_slab, packed)
    jax.block_until_ready((final_dist, hx1, cx1))

    ref_final, ref_hx, ref_cx = decoder_reference(
        t_input, hx0, cx0, enc_out, enc_feat, mask, params)
    assert jnp.allclose(final_dist, ref_final, atol=1e-4, rtol=1e-4)
    assert jnp.allclose(hx1, ref_hx, atol=1e-4, rtol=1e-4)
    assert jnp.allclose(cx1, ref_cx, atol=1e-4, rtol=1e-4)

    print("KERNEL_OK")
</pallas_src>

<mosaic_0001>
module attributes {stable_mosaic.version = 11 : i64} {
  func.func @decoder_kernel(%arg0: memref<2xi32, #tpu.memory_space<smem>>, %arg1: memref<12x16xf32, #tpu.memory_space<vmem>>, %arg2: memref<2x32xf32, #tpu.memory_space<vmem>>, %arg3: memref<2x32xf32, #tpu.memory_space<vmem>>, %arg4: memref<16x65xf32, #tpu.memory_space<vmem>>, %arg5: memref<49x128xf32, #tpu.memory_space<vmem>>, %arg6: memref<64x96xf32, #tpu.memory_space<vmem>>, %arg7: memref<2x32xf32, #tpu.memory_space<vmem>>, %arg8: memref<2x32xf32, #tpu.memory_space<vmem>>, %arg9: memref<2x32xf32, #tpu.memory_space<vmem>>) attributes {dimension_semantics = [], scalar_prefetch = 0 : i64, scratch_operands = 0 : i64, tpu.core_type = #tpu.core_type<tc>} {
    %0 = tpu.iota {dimensions = array<i32: 1>} : vector<1x12xi32>
    %c0 = arith.constant 0 : index
    %1 = memref.load %arg0[%c0] : memref<2xi32, #tpu.memory_space<smem>>
    %2 = vector.broadcast %1 : i32 to vector<1x12xi32>
    %3 = arith.cmpi eq, %0, %2 : vector<1x12xi32>
    %4 = arith.extui %3 : vector<1x12xi1> to vector<1x12xi32>
    %5 = arith.sitofp %4 : vector<1x12xi32> to vector<1x12xf32>
    %c1 = arith.constant 1 : index
    %6 = memref.load %arg0[%c1] : memref<2xi32, #tpu.memory_space<smem>>
    %7 = vector.broadcast %6 : i32 to vector<1x12xi32>
    %8 = arith.cmpi eq, %0, %7 : vector<1x12xi32>
    %9 = arith.extui %8 : vector<1x12xi1> to vector<1x12xi32>
    %10 = arith.sitofp %9 : vector<1x12xi32> to vector<1x12xf32>
    %11 = tpu.concatenate %5, %10 in 0 : vector<1x12xf32>, vector<1x12xf32> -> vector<2x12xf32>
    %c0_0 = arith.constant 0 : index
    %c0_1 = arith.constant 0 : index
    %12 = vector.load %arg1[%c0_0, %c0_1] : memref<12x16xf32, #tpu.memory_space<vmem>>, vector<12x16xf32>
    %cst = arith.constant dense<0.000000e+00> : vector<2x16xf32>
    %13 = tpu.matmul %11, %12, %cst {dimension_numbers = #tpu.dot_dimension_numbers<[1], [0], [0], [1], [0, 0, 1, 1], [], []>} : vector<2x12xf32>, vector<12x16xf32>, vector<2x16xf32> -> vector<2x16xf32>
    %c0_2 = arith.constant 0 : index
    %c0_3 = arith.constant 0 : index
    %14 = vector.load %arg2[%c0_2, %c0_3] : memref<2x32xf32, #tpu.memory_space<vmem>>, vector<2x32xf32>
    %c0_4 = arith.constant 0 : index
    %c0_5 = arith.constant 0 : index
    %15 = vector.load %arg3[%c0_4, %c0_5] : memref<2x32xf32, #tpu.memory_space<vmem>>, vector<2x32xf32>
    %c0_6 = arith.constant 0 : index
    %c0_7 = arith.constant 0 : index
    %16 = vector.load %arg5[%c0_6, %c0_7] : memref<49x128xf32, #tpu.memory_space<vmem>>, vector<16x128xf32>
    %cst_8 = arith.constant dense<0.000000e+00> : vector<2x128xf32>
    %17 = tpu.matmul %13, %16, %cst_8 {dimension_numbers = #tpu.dot_dimension_numbers<[1], [0], [0], [1], [0, 0, 1, 1], [], []>} : vector<2x16xf32>, vector<16x128xf32>, vector<2x128xf32> -> vector<2x128xf32>
    %c16 = arith.constant 16 : index
    %c0_9 = arith.constant 0 : index
    %18 = vector.load %arg5[%c16, %c0_9] : memref<49x128xf32, #tpu.memory_space<vmem>>, vector<32x128xf32>
    %cst_10 = arith.constant dense<0.000000e+00> : vector<2x128xf32>
    %19 = tpu.matmul %14, %18, %cst_10 {dimension_numbers = #tpu.dot_dimension_numbers<[1], [0], [0], [1], [0, 0, 1, 1], [], []>} : vector<2x32xf32>, vector<32x128xf32>, vector<2x128xf32> -> vector<2x128xf32>
    %20 = arith.addf %17, %19 : vector<2x128xf32>
    %c48 = arith.constant 48 : index
    %c0_11 = arith.constant 0 : index
    %21 = vector.load %arg5[%c48, %c0_11] : memref<49x128xf32, #tpu.memory_space<vmem>>, vector<1x128xf32>
    %22 = vector.broadcast %21 : vector<1x128xf32> to vector<2x128xf32>
    %23 = arith.addf %20, %22 : vector<2x128xf32>
    %24 = vector.extract_strided_slice %23 {offsets = [0, 0], sizes = [2, 32], strides = [1, 1]} : vector<2x128xf32> to vector<2x32xf32>
    %25 = arith.negf %24 : vector<2x32xf32>
    %26 = math.exp %25 : vector<2x32xf32>
    %cst_12 = arith.constant 1.000000e+00 : f32
    %27 = vector.broadcast %cst_12 : f32 to vector<2x32xf32>
    %28 = arith.addf %27, %26 : vector<2x32xf32>
    %29 = arith.divf %27, %28 : vector<2x32xf32>
    %30 = vector.extract_strided_slice %23 {offsets = [0, 32], sizes = [2, 32], strides = [1, 1]} : vector<2x128xf32> to vector<2x32xf32>
    %31 = arith.negf %30 : vector<2x32xf32>
    %32 = math.exp %31 : vector<2x32xf32>
    %cst_13 = arith.constant 1.000000e+00 : f32
    %33 = vector.broadcast %cst_13 : f32 to vector<2x32xf32>
    %34 = arith.addf %33, %32 : vector<2x32xf32>
    %35 = arith.divf %33, %34 : vector<2x32xf32>
    %36 = vector.extract_strided_slice %23 {offsets = [0, 64], sizes = [2, 32], strides = [1, 1]} : vector<2x128xf32> to vector<2x32xf32>
    %37 = math.tanh %36 : vector<2x32xf32>
    %38 = vector.extract_strided_slice %23 {offsets = [0, 96], sizes = [2, 32], strides = [1, 1]} : vector<2x128xf32> to vector<2x32xf32>
    %39 = arith.negf %38 : vector<2x32xf32>
    %40 = math.exp %39 : vector<2x32xf32>
    %cst_14 = arith.constant 1.000000e+00 : f32
    %41 = vector.broadcast %cst_14 : f32 to vector<2x32xf32>
    %42 = arith.addf %41, %40 : vector<2x32xf32>
    %43 = arith.divf %41, %42 : vector<2x32xf32>
    %44 = arith.mulf %35, %15 : vector<2x32xf32>
    %45 = arith.mulf %29, %37 : vector<2x32xf32>
    %46 = arith.addf %44, %45 : vector<2x32xf32>
    %47 = math.tanh %46 : vector<2x32xf32>
    %48 = arith.mulf %43, %47 : vector<2x32xf32>
    %c0_15 = arith.constant 0 : index
    %c0_16 = arith.constant 0 : index
    %49 = vector.load %arg6[%c0_15, %c0_16] : memref<64x96xf32, #tpu.memory_space<vmem>>, vector<32x32xf32>
    %c32 = arith.constant 32 : index
    %c0_17 = arith.constant 0 : index
    %50 = vector.load %arg6[%c32, %c0_17] : memref<64x96xf32, #tpu.memory_space<vmem>>, vector<32x32xf32>
    %c0_18 = arith.constant 0 : index
    %c32_19 = arith.constant 32 : index
    %51 = vector.load %arg6[%c0_18, %c32_19] : memref<64x96xf32, #tpu.memory_space<vmem>>, vector<32x32xf32>
    %c32_20 = arith.constant 32 : index
    %c32_21 = arith.constant 32 : index
    %52 = vector.load %arg6[%c32_20, %c32_21] : memref<64x96xf32, #tpu.memory_space<vmem>>, vector<1x32xf32>
    %c33 = arith.constant 33 : index
    %c32_22 = arith.constant 32 : index
    %53 = vector.load %arg6[%c33, %c32_22] : memref<64x96xf32, #tpu.memory_space<vmem>>, vector<1x32xf32>
    %c0_23 = arith.constant 0 : index
    %c64 = arith.constant 64 : index
    %54 = vector.load %arg6[%c0_23, %c64] : memref<64x96xf32, #tpu.memory_space<vmem>>, vector<32x1xf32>
    %c0_24 = arith.constant 0 : index
    %c65 = arith.constant 65 : index
    %55 = vector.load %arg6[%c0_24, %c65] : memref<64x96xf32, #tpu.memory_space<vmem>>, vector<16x2xf32>
    %c0_25 = arith.constant 0 : index
    %c67 = arith.constant 67 : index
    %56 = vector.load %arg6[%c0_25, %c67] : memref<64x96xf32, #tpu.memory_space<vmem>>, vector<2x16xf32>
    %c0_26 = arith.constant 0 : index
    %c0_27 = arith.constant 0 : index
    %57 = vector.load %arg4[%c0_26, %c0_27] : memref<16x65xf32, #tpu.memory_space<vmem>>, vector<16x32xf32>
    %c0_28 = arith.constant 0 : index
    %c32_29 = arith.constant 32 : index
    %58 = vector.load %arg4[%c0_28, %c32_29] : memref<16x65xf32, #tpu.memory_space<vmem>>, vector<16x32xf32>
    %c0_30 = arith.constant 0 : index
    %c64_31 = arith.constant 64 : index
    %59 = vector.load %arg4[%c0_30, %c64_31] : memref<16x65xf32, #tpu.memory_space<vmem>>, vector<16x1xf32>
    %cst_32 = arith.constant dense<0.000000e+00> : vector<2x32xf32>
    %60 = tpu.matmul %48, %51, %cst_32 {dimension_numbers = #tpu.dot_dimension_numbers<[1], [0], [0], [1], [0, 0, 1, 1], [], []>} : vector<2x32xf32>, vector<32x32xf32>, vector<2x32xf32> -> vector<2x32xf32>
    %61 = vector.broadcast %52 : vector<1x32xf32> to vector<2x32xf32>
    %62 = arith.addf %60, %61 : vector<2x32xf32>
    %cst_33 = arith.constant dense<0.000000e+00> : vector<16x32xf32>
    %63 = tpu.matmul %55, %62, %cst_33 {dimension_numbers = #tpu.dot_dimension_numbers<[1], [0], [0], [1], [0, 0, 1, 1], [], []>} : vector<16x2xf32>, vector<2x32xf32>, vector<16x32xf32> -> vector<16x32xf32>
    %64 = arith.addf %57, %63 : vector<16x32xf32>
    %65 = math.tanh %64 : vector<16x32xf32>
    %cst_34 = arith.constant dense<0.000000e+00> : vector<16x1xf32>
    %66 = tpu.matmul %65, %54, %cst_34 {dimension_numbers = #tpu.dot_dimension_numbers<[1], [0], [0], [1], [0, 0, 1, 1], [], []>} : vector<16x32xf32>, vector<32x1xf32>, vector<16x1xf32> -> vector<16x1xf32>
    %67 = math.exp %66 : vector<16x1xf32>
    %68 = arith.mulf %67, %59 : vector<16x1xf32>
    %69 = vector.broadcast %68 : vector<16x1xf32> to vector<16x32xf32>
    %70 = arith.mulf %69, %58 : vector<16x32xf32>
    %cst_35 = arith.constant dense<0.000000e+00> : vector<2x32xf32>
    %71 = tpu.matmul %56, %70, %cst_35 {dimension_numbers = #tpu.dot_dimension_numbers<[1], [0], [0], [1], [0, 0, 1, 1], [], []>} : vector<2x16xf32>, vector<16x32xf32>, vector<2x32xf32> -> vector<2x32xf32>
    %cst_36 = arith.constant dense<0.000000e+00> : vector<2x1xf32>
    %72 = tpu.matmul %56, %67, %cst_36 {dimension_numbers = #tpu.dot_dimension_numbers<[1], [0], [0], [1], [0, 0, 1, 1], [], []>} : vector<2x16xf32>, vector<16x1xf32>, vector<2x1xf32> -> vector<2x1xf32>
    %73 = vector.broadcast %72 : vector<2x1xf32> to vector<2x32xf32>
    %74 = arith.divf %71, %73 : vector<2x32xf32>
    %cst_37 = arith.constant dense<0.000000e+00> : vector<2x32xf32>
    %75 = tpu.matmul %74, %49, %cst_37 {dimension_numbers = #tpu.dot_dimension_numbers<[1], [0], [0], [1], [0, 0, 1, 1], [], []>} : vector<2x32xf32>, vector<32x32xf32>, vector<2x32xf32> -> vector<2x32xf32>
    %cst_38 = arith.constant dense<0.000000e+00> : vector<2x32xf32>
    %76 = tpu.matmul %48, %50, %cst_38 {dimension_numbers = #tpu.dot_dimension_numbers<[1], [0], [0], [1], [0, 0, 1, 1], [], []>} : vector<2x32xf32>, vector<32x32xf32>, vector<2x32xf32> -> vector<2x32xf32>
    %77 = arith.addf %75, %76 : vector<2x32xf32>
    %78 = vector.broadcast %53 : vector<1x32xf32> to vector<2x32xf32>
    %79 = arith.addf %77, %78 : vector<2x32xf32>
    %80 = math.tanh %79 : vector<2x32xf32>
    %c0_39 = arith.constant 0 : index
    %c0_40 = arith.constant 0 : index
    %81 = vector.load %arg7[%c0_39, %c0_40] : memref<2x32xf32, #tpu.memory_space<vmem>>, vector<2x32xf32>
    tpu.vector_store %arg7[%c0_39, %c0_40], %80 {strides = array<i32>} : memref<2x32xf32, #tpu.memory_space<vmem>>, vector<2x32xf32>,
    %c0_41 = arith.constant 0 : index
    %c0_42 = arith.constant 0 : index
    %82 = vector.load %arg8[%c0_41, %c0_42] : memref<2x32xf32, #tpu.memory_space<vmem>>, vector<2x32xf32>
    tpu.vector_store %arg8[%c0_41, %c0_42], %48 {strides = array<i32>} : memref<2x32xf32, #tpu.memory_space<vmem>>, vector<2x32xf32>,
    %c0_43 = arith.constant 0 : index
    %c0_44 = arith.constant 0 : index
    %83 = vector.load %arg9[%c0_43, %c0_44] : memref<2x32xf32, #tpu.memory_space<vmem>>, vector<2x32xf32>
    tpu.vector_store %arg9[%c0_43, %c0_44], %46 {strides = array<i32>} : memref<2x32xf32, #tpu.memory_space<vmem>>, vector<2x32xf32>,
    return
  }
}

</mosaic_0001>

<llo_original>
// kernel: decoder_forward.1
$region0: #{decoder_forward.1}
  #allocation0 [shape = 'u32[]', space=smem, size = 0x4, offset = 0x4, fixed_abs, tag = 'smem constant byte address 0x4 - core index']
  #allocation1 [shape = 'u32[144,128]{1,0:T(1,128)}', space=vmem, size = 0x12000, scoped, tag = 'internal scratch']
  %s0 = inlined_call_operand.hbm [shape: s32[2], index: 0, kind: input, shape index: {}]
  %s1 = inlined_call_operand.hbm [shape: f32[12,16], index: 1, kind: input, shape index: {}]
  %s2 = inlined_call_operand.hbm [shape: f32[2,32], index: 2, kind: input, shape index: {}]
  %s3 = inlined_call_operand.vmem [shape: f32[2,32], index: 3, kind: input, shape index: {}]
  %s4 = inlined_call_operand.hbm [shape: f32[16,65], index: 4, kind: input, shape index: {}]
  %s5 = inlined_call_operand.hbm [shape: f32[49,128], index: 5, kind: input, shape index: {}]
  %s6 = inlined_call_operand.hbm [shape: f32[64,96], index: 6, kind: input, shape index: {}]
  %s7 = inlined_call_operand.hbm [shape: f32[2,32], index: 7, kind: output, shape index: {0}]
  %s8 = inlined_call_operand.hbm [shape: f32[2,32], index: 8, kind: output, shape index: {1}]
  %s9 = inlined_call_operand.hbm [shape: f32[2,32], index: 9, kind: output, shape index: {2}]
  %10 = xla_tuple %s7, %s8, %s9
  %s11 = sld [smem:[#allocation0]]
  $region78: #{decoder_forward.1} parent=0
    _
  %s13 = ssub.s32 1, %s11
  %s14 = scalar_select 0, %s13, %s11
  $region1: #{decoder_forward.1} parent=0
    #allocation2 [shape = 'u8[512]{0}', space=smem, size = 0x200, scoped, tag = 'input window, operand 0, single buffered']
    #allocation3 [shape = 's32[1]{0}', space=sflag, size = 0x4, scoped, tag = 'scoped memory for decoder_forward.1']
    #allocation4 [shape = 's32[1]{0}', space=sflag, size = 0x4, scoped, tag = 'scoped memory for decoder_forward.1']
    #allocation5 [shape = 's32[1]{0}', space=sflag, size = 0x4, scoped, tag = 'scoped memory for decoder_forward.1']
    #allocation6 [shape = 'u8[8192]{0}', space=vmem, size = 0x2000, scoped, tag = 'input window, operand 1, single buffered']
    #allocation7 [shape = 'u8[1024]{0}', space=vmem, size = 0x400, scoped, tag = 'input window, operand 2, single buffered']
    #allocation8 [shape = 's32[1]{0}', space=sflag, size = 0x4, scoped, tag = 'scoped memory for decoder_forward.1']
    #allocation9 [shape = 'u8[8192]{0}', space=vmem, size = 0x2000, scoped, tag = 'input window, operand 4, single buffered']
    #allocation10 [shape = 'u8[28672]{0}', space=vmem, size = 0x7000, scoped, tag = 'input window, operand 5, single buffered']
    #allocation11 [shape = 's32[1]{0}', space=sflag, size = 0x4, scoped, tag = 'scoped memory for decoder_forward.1']
    #allocation12 [shape = 'u8[32768]{0}', space=vmem, size = 0x8000, scoped, tag = 'input window, operand 6, single buffered']
    #allocation13 [shape = 'u8[1024]{0}', space=vmem, size = 0x400, scoped, tag = 'output window, operand 0, single buffered']
    #allocation14 [shape = 'u8[1024]{0}', space=vmem, size = 0x400, scoped, tag = 'output window, operand 1, single buffered']
    #allocation15 [shape = 's32[1]{0}', space=sflag, size = 0x4, scoped, tag = 'scoped memory for decoder_forward.1']
    #allocation16 [shape = 'u8[1024]{0}', space=vmem, size = 0x400, scoped, tag = 'output window, operand 2, single buffered']
    %15 = vsyncpa [#allocation5], 0
    %16 = vsyncpa [#allocation3], 0
    %17 = vsyncpa [#allocation8], 0
    %18 = vsyncpa [#allocation11], 0
    %19 = vsyncpa [#allocation4], 0
    %20 = vsyncpa [#allocation15], 0
    // Predicated region
    $region2: #{decoder_forward.1} parent=1 // pred_check
      _
    $region3: #{decoder_forward.1} parent=1 // pred_check_branch
      %22 = sbr.rel (0) target = $region5
    $region4: #{decoder_forward.1} parent=1 // pred_region
      %s24 = ssub.s32 16, 16
      %25 = vsyncadd [#allocation5], %s24
      %28 = dma.hbm_to_smem %s0, 16, [#allocation2], [#allocation5]
    $region5: #{decoder_forward.1} parent=1 // pred_fallthru
      _
    // Predicated region
    $region6: #{decoder_forward.1} parent=1 // pred_check
      _
    $region7: #{decoder_forward.1} parent=1 // pred_check_branch
      %30 = sbr.rel (0) target = $region9
    $region8: #{decoder_forward.1} parent=1 // pred_region
      %s32 = ssub.s32 256, 256
      %33 = vsyncadd [#allocation3], %s32
      %s34 = sshll.u32 [#allocation6], 4
      %s35 = int_to_ptr.vmem [resolvable:$true] %s34
      %40 = dma.hbm_to_vmem [thread:$0]  %s1, 256, %s35, [#allocation3], 128, 128, 8
    $region9: #{decoder_forward.1} parent=1 // pred_fallthru
      _
    // Predicated region
    $region10: #{decoder_forward.1} parent=1 // pred_check
      _
    $region11: #{decoder_forward.1} parent=1 // pred_check_branch
      %42 = sbr.rel (0) target = $region13
    $region12: #{decoder_forward.1} parent=1 // pred_region
      %s44 = ssub.s32 32, 32
      %45 = vsyncadd [#allocation8], %s44
      %s47 = sshll.u32 [#allocation7], 4
      %s48 = int_to_ptr.vmem [resolvable:$true] %s47
      %50 = dma.hbm_to_vmem [thread:$0]  %s2, 32, %s48, [#allocation8]
    $region13: #{decoder_forward.1} parent=1 // pred_fallthru
      _
    // Predicated region
    $region14: #{decoder_forward.1} parent=1 // pred_check
      _
    $region15: #{decoder_forward.1} parent=1 // pred_check_branch
      %52 = sbr.rel (0) target = $region17
    $region16: #{decoder_forward.1} parent=1 // pred_region
      _
    $region17: #{decoder_forward.1} parent=1 // pred_fallthru
      _
    // Predicated region
    $region18: #{decoder_forward.1} parent=1 // pred_check
      _
    $region19: #{decoder_forward.1} parent=1 // pred_check_branch
      %54 = sbr.rel (0) target = $region21
    $region20: #{decoder_forward.1} parent=1 // pred_region
      %s56 = ssub.s32 256, 256
      %57 = vsyncadd [#allocation8], %s56
      %s58 = sshll.u32 [#allocation9], 4
      %s59 = int_to_ptr.vmem [resolvable:$true] %s58
      %64 = dma.hbm_to_vmem [thread:$0]  %s4, 256, %s59, [#allocation8], 128, 128, 8
    $region21: #{decoder_forward.1} parent=1 // pred_fallthru
      _
    // Predicated region
    $region22: #{decoder_forward.1} parent=1 // pred_check
      _
    $region23: #{decoder_forward.1} parent=1 // pred_check_branch
      %66 = sbr.rel (0) target = $region25
    $region24: #{decoder_forward.1} parent=1 // pred_region
      %s68 = ssub.s32 896, 896
      %69 = vsyncadd [#allocation11], %s68
      %s70 = sshll.u32 [#allocation10], 4
      %s71 = int_to_ptr.vmem [resolvable:$true] %s70
      %76 = dma.hbm_to_vmem [thread:$0]  %s5, 896, %s71, [#allocation11], 128, 128, 8
    $region25: #{decoder_forward.1} parent=1 // pred_fallthru
      _
    // Predicated region
    $region26: #{decoder_forward.1} parent=1 // pred_check
      _
    $region27: #{decoder_forward.1} parent=1 // pred_check_branch
      %78 = sbr.rel (0) target = $region29
    $region28: #{decoder_forward.1} parent=1 // pred_region
      %s80 = ssub.s32 1024, 1024
      %81 = vsyncadd [#allocation11], %s80
      %s82 = sshll.u32 [#allocation12], 4
      %s83 = int_to_ptr.vmem [resolvable:$true] %s82
      %88 = dma.hbm_to_vmem [thread:$0]  %s6, 1024, %s83, [#allocation11], 128, 128, 8
    $region29: #{decoder_forward.1} parent=1 // pred_fallthru
      _
    // Predicated region
    $region30: #{decoder_forward.1} parent=1 // pred_check
      _
    $region31: #{decoder_forward.1} parent=1 // pred_check_branch
      %90 = sbr.rel (0) target = $region33
    $region32: #{decoder_forward.1} parent=1 // pred_region
      %91 = dma.done [#allocation5], 16
    $region33: #{decoder_forward.1} parent=1 // pred_fallthru
      _
    // Predicated region
    $region34: #{decoder_forward.1} parent=1 // pred_check
      _
    $region35: #{decoder_forward.1} parent=1 // pred_check_branch
      %93 = sbr.rel (0) target = $region37
    $region36: #{decoder_forward.1} parent=1 // pred_region
      %94 = dma.done [#allocation3], 256
    $region37: #{decoder_forward.1} parent=1 // pred_fallthru
      _
    // Predicated region
    $region38: #{decoder_forward.1} parent=1 // pred_check
      _
    $region39: #{decoder_forward.1} parent=1 // pred_check_branch
      %96 = sbr.rel (0) target = $region41
    $region40: #{decoder_forward.1} parent=1 // pred_region
      %97 = dma.done [#allocation8], 32
    $region41: #{decoder_forward.1} parent=1 // pred_fallthru
      _
    // Predicated region
    $region42: #{decoder_forward.1} parent=1 // pred_check
      _
    $region43: #{decoder_forward.1} parent=1 // pred_check_branch
      %99 = sbr.rel (0) target = $region45
    $region44: #{decoder_forward.1} parent=1 // pred_region
      %100 = dma.done [#allocation8], 256
    $region45: #{decoder_forward.1} parent=1 // pred_fallthru
      _
    // Predicated region
    $region46: #{decoder_forward.1} parent=1 // pred_check
      _
    $region47: #{decoder_forward.1} parent=1 // pred_check_branch
      %102 = sbr.rel (0) target = $region49
    $region48: #{decoder_forward.1} parent=1 // pred_region
      %103 = dma.done [#allocation11], 896
    $region49: #{decoder_forward.1} parent=1 // pred_fallthru
      _
    // Predicated region
    $region50: #{decoder_forward.1} parent=1 // pred_check
      _
    $region51: #{decoder_forward.1} parent=1 // pred_check_branch
      %105 = sbr.rel (0) target = $region53
    $region52: #{decoder_forward.1} parent=1 // pred_region
      %106 = dma.done [#allocation11], 1024
    $region53: #{decoder_forward.1} parent=1 // pred_fallthru
      _
    %107 = sfence
    %v108 = vlaneseq
    %v109 = vand.u32 %v108, 127
    %s110 = sld [smem:[#allocation2]]
    %v111 = vstv %s110
    %vm112 = vcmp.eq.s32.totalorder %v109, %v111
    %v113 = vsel %vm112, 1, 0
    %v114 = vcvt.s32.f32 %v113
    %s115 = sld [smem:[#allocation2 + $0x1]]
    %v116 = vstv %s115
    %vm117 = vcmp.eq.s32.totalorder %v109, %v116
    %v118 = vsel %vm117, 1, 0
    %v119 = vcvt.s32.f32 %v118
    %vm120 = vcmask 1040384
    %v121 = vsel %vm120, %v114, %v119
    %v122 = vld [vmem:[#allocation6] sm:$0xff]
    %v123 = vld [vmem:[#allocation6 + $0x8] sm:$0xf]
    %vm124 = vcmask 97280
    %v126 = vsel %vm124, %v121, 0
    %vm128 = vcmask 1043456
    %v130 = vsel %vm128, %v123, 0
    %132 = vmatprep.subr.mxu0 0.0
    %133 = vmatpush1.msra.mxu0 0.0
    %134 = vmatprep.subr.mxu0 0.0
    %135 = vmatpush1.msra.mxu0 0.0
    %136 = vmatprep.subr.mxu0 0.0
    %137 = vmatpush1.msra.mxu0 0.0
    %138 = vmatprep.subr.mxu0 0.0
    %139 = vmatpush1.msra.mxu0 0.0
    %140 = vmatprep.subr.mxu0 0.0
    %141 = vmatpush1.msra.mxu0 0.0
    %142 = vmatprep.subr.mxu0 0.0
    %143 = vmatpush1.msra.mxu0 0.0
    %144 = vmatprep.subr.mxu0 0.0
    %145 = vmatpush1.msra.mxu0 0.0
    %146 = vmatprep.subr.mxu0 0.0
    %147 = vmatpush1.msra.mxu0 0.0
    %148 = vmatprep.subr.mxu0 0.0
    %149 = vmatpush1.msra.mxu0 0.0
    %150 = vmatprep.subr.mxu0 0.0
    %151 = vmatpush1.msra.mxu0 0.0
    %152 = vmatprep.subr.mxu0 0.0
    %153 = vmatpush1.msra.mxu0 0.0
    %154 = vmatprep.subr.mxu0 0.0
    %155 = vmatpush1.msra.mxu0 0.0
    %156 = vmatprep.subr.mxu0 0.0
    %157 = vmatpush1.msra.mxu0 0.0
    %158 = vmatprep.subr.mxu0 0.0
    %159 = vmatpush1.msra.mxu0 0.0
    %160 = vmatprep.subr.mxu0 0.0
    %161 = vmatpush1.msra.mxu0 %v130
    %162 = vmatprep.subr.mxu0 0.0
    %163 = vmatpush1.msra.mxu0 %v122
    %164 = vmatprep.subr.mxu0 0.0
    %165 = vmatpush2.msra.mxu0 0.0
    %166 = vmatprep.subr.mxu0 0.0
    %167 = vmatpush2.msra.mxu0 0.0
    %168 = vmatprep.subr.mxu0 0.0
    %169 = vmatpush2.msra.mxu0 0.0
    %170 = vmatprep.subr.mxu0 0.0
    %171 = vmatpush2.msra.mxu0 0.0
    %172 = vmatprep.subr.mxu0 0.0
    %173 = vmatpush2.msra.mxu0 0.0
    %174 = vmatprep.subr.mxu0 0.0
    %175 = vmatpush2.msra.mxu0 0.0
    %176 = vmatprep.subr.mxu0 0.0
    %177 = vmatpush2.msra.mxu0 0.0
    %178 = vmatprep.subr.mxu0 0.0
    %179 = vmatpush2.msra.mxu0 0.0
    %180 = vmatprep.subr.mxu0 0.0
    %181 = vmatpush2.msra.mxu0 0.0
    %182 = vmatprep.subr.mxu0 0.0
    %183 = vmatpush2.msra.mxu0 0.0
    %184 = vmatprep.subr.mxu0 0.0
    %185 = vmatpush2.msra.mxu0 0.0
    %186 = vmatprep.subr.mxu0 0.0
    %187 = vmatpush2.msra.mxu0 0.0
    %188 = vmatprep.subr.mxu0 0.0
    %189 = vmatpush2.msra.mxu0 0.0
    %190 = vmatprep.subr.mxu0 0.0
    %191 = vmatpush2.msra.mxu0 0.0
    %192 = vmatprep.subr.mxu0 0.0
    %193 = vmatpush2.msra.mxu0 0.0
    %194 = vmatprep.subr.mxu0 0.0
    %195 = vmatpush2.msra.mxu0 0.0
    %196 = vmatprep.mubr.f32.mxu0 0.0
    %197 = vmatmul.mubr.f32.gmra.mxu0 %v126
    %v198 = vpop.f32.mrf.mxu0
    %v199 = vadd.f32 0.0, %v198
    %v200 = vpop.f32.mrf.mxu0
    %201 = vdwg.mxu0
    %v202 = vld [vmem:[#allocation7] sm:$0x3]
    %v203 = vld [vmem:[%s3] sm:$0x3]
    %v204 = vld [vmem:[#allocation10] sm:$0xff]
    %v205 = vld [vmem:[#allocation10 + $0x8] sm:$0xff]
    %v206 = vld [vmem:[#allocation10 + $0x10] sm:$0xff]
    %v207 = vld [vmem:[#allocation10 + $0x18] sm:$0xff]
    %v208 = vld [vmem:[#allocation10 + $0x20] sm:$0xff]
    %v209 = vld [vmem:[#allocation10 + $0x28] sm:$0xff]
    %vm210 = vcmask 261120
    %v212 = vsel %vm210, %v202, 0
    %214 = vmatprep.subr.mxu0 0.0
    %215 = vmatpush1.msra.mxu0 0.0
    %216 = vmatprep.subr.mxu0 0.0
    %217 = vmatpush1.msra.mxu0 0.0
    %218 = vmatprep.subr.mxu0 0.0
    %219 = vmatpush1.msra.mxu0 0.0
    %220 = vmatprep.subr.mxu0 0.0
    %221 = vmatpush1.msra.mxu0 0.0
    %222 = vmatprep.subr.mxu0 0.0
    %223 = vmatpush1.msra.mxu0 0.0
    %224 = vmatprep.subr.mxu0 0.0
    %225 = vmatpush1.msra.mxu0 0.0
    %226 = vmatprep.subr.mxu0 0.0
    %227 = vmatpush1.msra.mxu0 0.0
    %228 = vmatprep.subr.mxu0 0.0
    %229 = vmatpush1.msra.mxu0 0.0
    %230 = vmatprep.subr.mxu0 0.0
    %231 = vmatpush1.msra.mxu0 0.0
    %232 = vmatprep.subr.mxu0 0.0
    %233 = vmatpush1.msra.mxu0 0.0
    %234 = vmatprep.subr.mxu0 0.0
    %235 = vmatpush1.msra.mxu0 0.0
    %236 = vmatprep.subr.mxu0 0.0
    %237 = vmatpush1.msra.mxu0 0.0
    %238 = vmatprep.subr.mxu0 0.0
    %239 = vmatpush1.msra.mxu0 %v209
    %240 = vmatprep.subr.mxu0 0.0
    %241 = vmatpush1.msra.mxu0 %v208
    %242 = vmatprep.subr.mxu0 0.0
    %243 = vmatpush1.msra.mxu0 %v207
    %244 = vmatprep.subr.mxu0 0.0
    %245 = vmatpush1.msra.mxu0 %v206
    %246 = vmatprep.subr.mxu0 0.0
    %247 = vmatpush2.msra.mxu0 0.0
    %248 = vmatprep.subr.mxu0 0.0
    %249 = vmatpush2.msra.mxu0 0.0
    %250 = vmatprep.subr.mxu0 0.0
    %251 = vmatpush2.msra.mxu0 0.0
    %252 = vmatprep.subr.mxu0 0.0
    %253 = vmatpush2.msra.mxu0 0.0
    %254 = vmatprep.subr.mxu0 0.0
    %255 = vmatpush2.msra.mxu0 0.0
    %256 = vmatprep.subr.mxu0 0.0
    %257 = vmatpush2.msra.mxu0 0.0
    %258 = vmatprep.subr.mxu0 0.0
    %259 = vmatpush2.msra.mxu0 0.0
    %260 = vmatprep.subr.mxu0 0.0
    %261 = vmatpush2.msra.mxu0 0.0
    %262 = vmatprep.subr.mxu0 0.0
    %263 = vmatpush2.msra.mxu0 0.0
    %264 = vmatprep.subr.mxu0 0.0
    %265 = vmatpush2.msra.mxu0 0.0
    %266 = vmatprep.subr.mxu0 0.0
    %267 = vmatpush2.msra.mxu0 0.0
    %268 = vmatprep.subr.mxu0 0.0
    %269 = vmatpush2.msra.mxu0 0.0
    %270 = vmatprep.subr.mxu0 0.0
    %271 = vmatpush2.msra.mxu0 0.0
    %272 = vmatprep.subr.mxu0 0.0
    %273 = vmatpush2.msra.mxu0 0.0
    %274 = vmatprep.subr.mxu0 0.0
    %275 = vmatpush2.msra.mxu0 0.0
    %276 = vmatprep.subr.mxu0 0.0
    %277 = vmatpush2.msra.mxu0 0.0
    %278 = vmatprep.mubr.f32.mxu0 0.0
    %279 = vmatmul.mubr.f32.gmra.mxu0 %v212
    %v280 = vpop.f32.mrf.mxu0
    %v281 = vadd.f32 0.0, %v280
    %v282 = vpop.f32.mrf.mxu0
    %283 = vdwg.mxu0
    %vm284 = vcmask 130048
    %v286 = vsel %vm284, %v199, 0
    %288 = vmatprep.subr.mxu0 0.0
    %289 = vmatpush1.msra.mxu0 0.0
    %290 = vmatprep.subr.mxu0 0.0
    %291 = vmatpush1.msra.mxu0 0.0
    %292 = vmatprep.subr.mxu0 0.0
    %293 = vmatpush1.msra.mxu0 0.0
    %294 = vmatprep.subr.mxu0 0.0
    %295 = vmatpush1.msra.mxu0 0.0
    %296 = vmatprep.subr.mxu0 0.0
    %297 = vmatpush1.msra.mxu0 0.0
    %298 = vmatprep.subr.mxu0 0.0
    %299 = vmatpush1.msra.mxu0 0.0
    %300 = vmatprep.subr.mxu0 0.0
    %301 = vmatpush1.msra.mxu0 0.0
    %302 = vmatprep.subr.mxu0 0.0
    %303 = vmatpush1.msra.mxu0 0.0
    %304 = vmatprep.subr.mxu0 0.0
    %305 = vmatpush1.msra.mxu0 0.0
    %306 = vmatprep.subr.mxu0 0.0
    %307 = vmatpush1.msra.mxu0 0.0
    %308 = vmatprep.subr.mxu0 0.0
    %309 = vmatpush1.msra.mxu0 0.0
    %310 = vmatprep.subr.mxu0 0.0
    %311 = vmatpush1.msra.mxu0 0.0
    %312 = vmatprep.subr.mxu0 0.0
    %313 = vmatpush1.msra.mxu0 0.0
    %314 = vmatprep.subr.mxu0 0.0
    %315 = vmatpush1.msra.mxu0 0.0
    %316 = vmatprep.subr.mxu0 0.0
    %317 = vmatpush1.msra.mxu0 %v205
    %318 = vmatprep.subr.mxu0 0.0
    %319 = vmatpush1.msra.mxu0 %v204
    %320 = vmatprep.subr.mxu0 0.0
    %321 = vmatpush2.msra.mxu0 0.0
    %322 = vmatprep.subr.mxu0 0.0
    %323 = vmatpush2.msra.mxu0 0.0
    %324 = vmatprep.subr.mxu0 0.0
    %325 = vmatpush2.msra.mxu0 0.0
    %326 = vmatprep.subr.mxu0 0.0
    %327 = vmatpush2.msra.mxu0 0.0
    %328 = vmatprep.subr.mxu0 0.0
    %329 = vmatpush2.msra.mxu0 0.0
    %330 = vmatprep.subr.mxu0 0.0
    %331 = vmatpush2.msra.mxu0 0.0
    %332 = vmatprep.subr.mxu0 0.0
    %333 = vmatpush2.msra.mxu0 0.0
    %334 = vmatprep.subr.mxu0 0.0
    %335 = vmatpush2.msra.mxu0 0.0
    %336 = vmatprep.subr.mxu0 0.0
    %337 = vmatpush2.msra.mxu0 0.0
    %338 = vmatprep.subr.mxu0 0.0
    %339 = vmatpush2.msra.mxu0 0.0
    %340 = vmatprep.subr.mxu0 0.0
    %341 = vmatpush2.msra.mxu0 0.0
    %342 = vmatprep.subr.mxu0 0.0
    %343 = vmatpush2.msra.mxu0 0.0
    %344 = vmatprep.subr.mxu0 0.0
    %345 = vmatpush2.msra.mxu0 0.0
    %346 = vmatprep.subr.mxu0 0.0
    %347 = vmatpush2.msra.mxu0 0.0
    %348 = vmatprep.subr.mxu0 0.0
    %349 = vmatpush2.msra.mxu0 0.0
    %350 = vmatprep.subr.mxu0 0.0
    %351 = vmatpush2.msra.mxu0 0.0
    %352 = vmatprep.mubr.f32.mxu0 0.0
    %353 = vmatmul.mubr.f32.gmra.mxu0 %v286
    %v354 = vpop.f32.mrf.mxu0
    %v355 = vadd.f32 %v281, %v354
    %v356 = vpop.f32.mrf.mxu0
    %357 = vdwg.mxu0
    %v358 = vld [vmem:[#allocation10 + $0x30] sm:$0x1]
    %v359 = vlaneseq
    %v360 = vshrl.u32 %v359, 7
    %v361 = vsub.s32 0, %v360
    %v362 = vrot.slane %v358, %v361
    %v363 = vadd.f32 %v355, %v362
    %v364 = vxor.u32 %v363, 2147483648
    %v365 = vmul.f32 %v364, 1.442695
    %v366 = vpow.pop %v365
    %v367 = vadd.f32 %v366, 1.0
    %v368 = vrcp.pop %v367
    %v369 = vmul.f32 1.0, %v368
    %v370 = vtanh.pop %v363
    %372 = vrot.lane.b32.xlu0 %v203, 32
    %v373 = vpop.permute.xlu0 %372
    %v375 = vmul.f32 %v369, %v373
    %377 = vrot.lane.b32.xlu0 %v370, 64
    %v378 = vpop.permute.xlu0 %377
    %v380 = vmul.f32 %v369, %v378
    %382 = vrot.lane.b32.xlu0 %v380, 32
    %v383 = vpop.permute.xlu0 %382
    %v385 = vadd.f32 %v375, %v383
    %v386 = vtanh.pop %v385
    %388 = vrot.lane.b32.xlu0 %v386, 64
    %v389 = vpop.permute.xlu0 %388
    %v391 = vmul.f32 %v369, %v389
    %v392 = vld [vmem:[#allocation12] sm:$0xff]
    %v393 = vld [vmem:[#allocation12 + $0x8] sm:$0xff]
    %v394 = vld [vmem:[#allocation12 + $0x10] sm:$0xff]
    %v395 = vld [vmem:[#allocation12 + $0x18] sm:$0xff]
    %v396 = vld [vmem:[#allocation12 + $0x20] sm:$0xff]
    %v397 = vld [vmem:[#allocation12 + $0x28] sm:$0xff]
    %v398 = vld [vmem:[#allocation12 + $0x30] sm:$0xff]
    %v399 = vld [vmem:[#allocation12 + $0x38] sm:$0xff]
    %v400 = vld [vmem:[#allocation12 + $0x20] sm:$0x1]
    %v401 = vld [vmem:[#allocation12 + $0x21] sm:$0x1]
    %v402 = vld [vmem:[#allocation12] sm:$0x3]
    %v403 = vld [vmem:[#allocation9] sm:$0xff]
    %v404 = vld [vmem:[#allocation9 + $0x8] sm:$0xff]
    %v405 = vlaneseq
    %v406 = vshrl.u32 %v405, 7
    %v407 = vsub.s32 0, %v406
    %v408 = vrot.slane %v400, %v407
    %410 = vrot.lane.b32.xlu0 %v391, 32
    %v411 = vpop.permute.xlu0 %410
    %416 = vrot.lane.b32.xlu0 %v392, 96
    %v417 = vpop.permute.xlu0 %416
    %418 = vrot.lane.b32.xlu0 %v393, 96
    %v419 = vpop.permute.xlu0 %418
    %420 = vrot.lane.b32.xlu0 %v394, 96
    %v421 = vpop.permute.xlu0 %420
    %422 = vrot.lane.b32.xlu0 %v395, 96
    %v423 = vpop.permute.xlu0 %422
    %429 = vrot.lane.b32.xlu0 %v408, 96
    %v430 = vpop.permute.xlu0 %429
    %v432 = vsel %vm210, %v411, 0
    %434 = vmatprep.subr.mxu0 0.0
    %435 = vmatpush1.msra.mxu0 0.0
    %436 = vmatprep.subr.mxu0 0.0
    %437 = vmatpush1.msra.mxu0 0.0
    %438 = vmatprep.subr.mxu0 0.0
    %439 = vmatpush1.msra.mxu0 0.0
    %440 = vmatprep.subr.mxu0 0.0
    %441 = vmatpush1.msra.mxu0 0.0
    %442 = vmatprep.subr.mxu0 0.0
    %443 = vmatpush1.msra.mxu0 0.0
    %444 = vmatprep.subr.mxu0 0.0
    %445 = vmatpush1.msra.mxu0 0.0
    %446 = vmatprep.subr.mxu0 0.0
    %447 = vmatpush1.msra.mxu0 0.0
    %448 = vmatprep.subr.mxu0 0.0
    %449 = vmatpush1.msra.mxu0 0.0
    %450 = vmatprep.subr.mxu0 0.0
    %451 = vmatpush1.msra.mxu0 0.0
    %452 = vmatprep.subr.mxu0 0.0
    %453 = vmatpush1.msra.mxu0 0.0
    %454 = vmatprep.subr.mxu0 0.0
    %455 = vmatpush1.msra.mxu0 0.0
    %456 = vmatprep.subr.mxu0 0.0
    %457 = vmatpush1.msra.mxu0 0.0
    %458 = vmatprep.subr.mxu0 0.0
    %459 = vmatpush1.msra.mxu0 %v423
    %460 = vmatprep.subr.mxu0 0.0
    %461 = vmatpush1.msra.mxu0 %v421
    %462 = vmatprep.subr.mxu0 0.0
    %463 = vmatpush1.msra.mxu0 %v419
    %464 = vmatprep.subr.mxu0 0.0
    %465 = vmatpush1.msra.mxu0 %v417
    %466 = vmatprep.subr.mxu0 0.0
    %467 = vmatpush2.msra.mxu0 0.0
    %468 = vmatprep.subr.mxu0 0.0
    %469 = vmatpush2.msra.mxu0 0.0
    %470 = vmatprep.subr.mxu0 0.0
    %471 = vmatpush2.msra.mxu0 0.0
    %472 = vmatprep.subr.mxu0 0.0
    %473 = vmatpush2.msra.mxu0 0.0
    %474 = vmatprep.subr.mxu0 0.0
    %475 = vmatpush2.msra.mxu0 0.0
    %476 = vmatprep.subr.mxu0 0.0
    %477 = vmatpush2.msra.mxu0 0.0
    %478 = vmatprep.subr.mxu0 0.0
    %479 = vmatpush2.msra.mxu0 0.0
    %480 = vmatprep.subr.mxu0 0.0
    %481 = vmatpush2.msra.mxu0 0.0
    %482 = vmatprep.subr.mxu0 0.0
    %483 = vmatpush2.msra.mxu0 0.0
    %484 = vmatprep.subr.mxu0 0.0
    %485 = vmatpush2.msra.mxu0 0.0
    %486 = vmatprep.subr.mxu0 0.0
    %487 = vmatpush2.msra.mxu0 0.0
    %488 = vmatprep.subr.mxu0 0.0
    %489 = vmatpush2.msra.mxu0 0.0
    %490 = vmatprep.subr.mxu0 0.0
    %491 = vmatpush2.msra.mxu0 0.0
    %492 = vmatprep.subr.mxu0 0.0
    %493 = vmatpush2.msra.mxu0 0.0
    %494 = vmatprep.subr.mxu0 0.0
    %495 = vmatpush2.msra.mxu0 0.0
    %496 = vmatprep.subr.mxu0 0.0
    %497 = vmatpush2.msra.mxu0 0.0
    %498 = vmatprep.mubr.f32.mxu0 0.0
    %499 = vmatmul.mubr.f32.gmra.mxu0 %v432
    %v500 = vpop.f32.mrf.mxu0
    %v501 = vadd.f32 %v430, %v500
    %v502 = vpop.f32.mrf.mxu0
    %503 = vdwg.mxu0
    %504 = vrot.lane.b32.xlu0 %v392, 63
    %v505 = vpop.permute.xlu0 %504
    %506 = vrot.lane.b32.xlu0 %v393, 63
    %v507 = vpop.permute.xlu0 %506
    %vm508 = vcmask 15360
    %v509 = vsel %vm508, %v505, 0
    %v511 = vsel %vm508, %v507, 0
    %vm513 = vcmask 1041408
    %v515 = vsel %vm513, %v501, 0
    %517 = vmatprep.subr.mxu0 0.0
    %518 = vmatpush1.msra.mxu0 0.0
    %519 = vmatprep.subr.mxu0 0.0
    %520 = vmatpush1.msra.mxu0 0.0
    %521 = vmatprep.subr.mxu0 0.0
    %522 = vmatpush1.msra.mxu0 0.0
    %523 = vmatprep.subr.mxu0 0.0
    %524 = vmatpush1.msra.mxu0 0.0
    %525 = vmatprep.subr.mxu0 0.0
    %526 = vmatpush1.msra.mxu0 0.0
    %527 = vmatprep.subr.mxu0 0.0
    %528 = vmatpush1.msra.mxu0 0.0
    %529 = vmatprep.subr.mxu0 0.0
    %530 = vmatpush1.msra.mxu0 0.0
    %531 = vmatprep.subr.mxu0 0.0
    %532 = vmatpush1.msra.mxu0 0.0
    %533 = vmatprep.subr.mxu0 0.0
    %534 = vmatpush1.msra.mxu0 0.0
    %535 = vmatprep.subr.mxu0 0.0
    %536 = vmatpush1.msra.mxu0 0.0
    %537 = vmatprep.subr.mxu0 0.0
    %538 = vmatpush1.msra.mxu0 0.0
    %539 = vmatprep.subr.mxu0 0.0
    %540 = vmatpush1.msra.mxu0 0.0
    %541 = vmatprep.subr.mxu0 0.0
    %542 = vmatpush1.msra.mxu0 0.0
    %543 = vmatprep.subr.mxu0 0.0
    %544 = vmatpush1.msra.mxu0 0.0
    %545 = vmatprep.subr.mxu0 0.0
    %546 = vmatpush1.msra.mxu0 0.0
    %547 = vmatprep.subr.mxu0 0.0
    %548 = vmatpush1.msra.mxu0 %v515
    %549 = vmatprep.subr.mxu0 0.0
    %550 = vmatpush2.msra.mxu0 0.0
    %551 = vmatprep.subr.mxu0 0.0
    %552 = vmatpush2.msra.mxu0 0.0
    %553 = vmatprep.subr.mxu0 0.0
    %554 = vmatpush2.msra.mxu0 0.0
    %555 = vmatprep.subr.mxu0 0.0
    %556 = vmatpush2.msra.mxu0 0.0
    %557 = vmatprep.subr.mxu0 0.0
    %558 = vmatpush2.msra.mxu0 0.0
    %559 = vmatprep.subr.mxu0 0.0
    %560 = vmatpush2.msra.mxu0 0.0
    %561 = vmatprep.subr.mxu0 0.0
    %562 = vmatpush2.msra.mxu0 0.0
    %563 = vmatprep.subr.mxu0 0.0
    %564 = vmatpush2.msra.mxu0 0.0
    %565 = vmatprep.subr.mxu0 0.0
    %566 = vmatpush2.msra.mxu0 0.0
    %567 = vmatprep.subr.mxu0 0.0
    %568 = vmatpush2.msra.mxu0 0.0
    %569 = vmatprep.subr.mxu0 0.0
    %570 = vmatpush2.msra.mxu0 0.0
    %571 = vmatprep.subr.mxu0 0.0
    %572 = vmatpush2.msra.mxu0 0.0
    %573 = vmatprep.subr.mxu0 0.0
    %574 = vmatpush2.msra.mxu0 0.0
    %575 = vmatprep.subr.mxu0 0.0
    %576 = vmatpush2.msra.mxu0 0.0
    %577 = vmatprep.subr.mxu0 0.0
    %578 = vmatpush2.msra.mxu0 0.0
    %579 = vmatprep.subr.mxu0 0.0
    %580 = vmatpush2.msra.mxu0 0.0
    %581 = vmatprep.mubr.f32.mxu0 0.0
    %582 = vmatmul.mubr.f32.gmra.mxu0 %v509
    %v583 = vpop.f32.mrf.mxu0
    %v584 = vadd.f32 0.0, %v583
    %v585 = vpop.f32.mrf.mxu0
    %586 = vmatprep.mubr.f32.mxu0 0.0
    %587 = vmatmul.mubr.f32.gmra.mxu0 %v511
    %v588 = vpop.f32.mrf.mxu0
    %v589 = vadd.f32 0.0, %v588
    %v590 = vpop.f32.mrf.mxu0
    %591 = vdwg.mxu0
    %v592 = vadd.f32 %v403, %v584
    %v593 = vadd.f32 %v404, %v589
    %v594 = vtanh.pop %v592
    %v595 = vtanh.pop %v593
    %596 = vrot.lane.b32.xlu0 %v392, 64
    %v597 = vpop.permute.xlu0 %596
    %598 = vrot.lane.b32.xlu0 %v393, 64
    %v599 = vpop.permute.xlu0 %598
    %600 = vrot.lane.b32.xlu0 %v394, 64
    %v601 = vpop.permute.xlu0 %600
    %602 = vrot.lane.b32.xlu0 %v395, 64
    %v603 = vpop.permute.xlu0 %602
    %v609 = vsel %vm210, %v594, 0
    %v612 = vsel %vm210, %v595, 0
    %614 = vmatprep.subr.mxu0 0.0
    %615 = vmatpush1.msra.mxu0 0.0
    %616 = vmatprep.subr.mxu0 0.0
    %617 = vmatpush1.msra.mxu0 0.0
    %618 = vmatprep.subr.mxu0 0.0
    %619 = vmatpush1.msra.mxu0 0.0
    %620 = vmatprep.subr.mxu0 0.0
    %621 = vmatpush1.msra.mxu0 0.0
    %622 = vmatprep.subr.mxu0 0.0
    %623 = vmatpush1.msra.mxu0 0.0
    %624 = vmatprep.subr.mxu0 0.0
    %625 = vmatpush1.msra.mxu0 0.0
    %626 = vmatprep.subr.mxu0 0.0
    %627 = vmatpush1.msra.mxu0 0.0
    %628 = vmatprep.subr.mxu0 0.0
    %629 = vmatpush1.msra.mxu0 0.0
    %630 = vmatprep.subr.mxu0 0.0
    %631 = vmatpush1.msra.mxu0 0.0
    %632 = vmatprep.subr.mxu0 0.0
    %633 = vmatpush1.msra.mxu0 0.0
    %634 = vmatprep.subr.mxu0 0.0
    %635 = vmatpush1.msra.mxu0 0.0
    %636 = vmatprep.subr.mxu0 0.0
    %637 = vmatpush1.msra.mxu0 0.0
    %638 = vmatprep.subr.mxu0 0.0
    %639 = vmatpush1.msra.mxu0 %v603
    %640 = vmatprep.subr.mxu0 0.0
    %641 = vmatpush1.msra.mxu0 %v601
    %642 = vmatprep.subr.mxu0 0.0
    %643 = vmatpush1.msra.mxu0 %v599
    %644 = vmatprep.subr.mxu0 0.0
    %645 = vmatpush1.msra.mxu0 %v597
    %646 = vmatprep.subr.mxu0 0.0
    %647 = vmatpush2.msra.mxu0 0.0
    %648 = vmatprep.subr.mxu0 0.0
    %649 = vmatpush2.msra.mxu0 0.0
    %650 = vmatprep.subr.mxu0 0.0
    %651 = vmatpush2.msra.mxu0 0.0
    %652 = vmatprep.subr.mxu0 0.0
    %653 = vmatpush2.msra.mxu0 0.0
    %654 = vmatprep.subr.mxu0 0.0
    %655 = vmatpush2.msra.mxu0 0.0
    %656 = vmatprep.subr.mxu0 0.0
    %657 = vmatpush2.msra.mxu0 0.0
    %658 = vmatprep.subr.mxu0 0.0
    %659 = vmatpush2.msra.mxu0 0.0
    %660 = vmatprep.subr.mxu0 0.0
    %661 = vmatpush2.msra.mxu0 0.0
    %662 = vmatprep.subr.mxu0 0.0
    %663 = vmatpush2.msra.mxu0 0.0
    %664 = vmatprep.subr.mxu0 0.0
    %665 = vmatpush2.msra.mxu0 0.0
    %666 = vmatprep.subr.mxu0 0.0
    %667 = vmatpush2.msra.mxu0 0.0
    %668 = vmatprep.subr.mxu0 0.0
    %669 = vmatpush2.msra.mxu0 0.0
    %670 = vmatprep.subr.mxu0 0.0
    %671 = vmatpush2.msra.mxu0 0.0
    %672 = vmatprep.subr.mxu0 0.0
    %673 = vmatpush2.msra.mxu0 0.0
    %674 = vmatprep.subr.mxu0 0.0
    %675 = vmatpush2.msra.mxu0 0.0
    %676 = vmatprep.subr.mxu0 0.0
    %677 = vmatpush2.msra.mxu0 0.0
    %678 = vmatprep.mubr.f32.mxu0 0.0
    %679 = vmatmul.mubr.f32.gmra.mxu0 %v609
    %v680 = vpop.f32.mrf.mxu0
    %v681 = vadd.f32 0.0, %v680
    %v682 = vpop.f32.mrf.mxu0
    %683 = vmatprep.mubr.f32.mxu0 0.0
    %684 = vmatmul.mubr.f32.gmra.mxu0 %v612
    %v685 = vpop.f32.mrf.mxu0
    %v686 = vadd.f32 0.0, %v685
    %v687 = vpop.f32.mrf.mxu0
    %688 = vdwg.mxu0
    %v689 = vmul.f32 %v681, 1.442695
    %v690 = vpow.pop %v689
    %v691 = vmul.f32 %v686, 1.442695
    %v692 = vpow.pop %v691
    %695 = vrot.lane.b32.xlu0 %v403, 64
    %v696 = vpop.permute.xlu0 %695
    %697 = vrot.lane.b32.xlu0 %v404, 64
    %v698 = vpop.permute.xlu0 %697
    %v701 = vmul.f32 %v690, %v696
    %v702 = vmul.f32 %v692, %v698
    %704 = vset.pattern.permute.xlu0 0
    %705 = vperm.xlu0 %704, %v701
    %v706 = vpop.permute.xlu0 %705
    %709 = vset.pattern.permute.xlu0 0
    %710 = vperm.xlu0 %709, %v702
    %v711 = vpop.permute.xlu0 %710
    %v713 = vmul.f32 %v706, %v403
    %v714 = vmul.f32 %v711, %v404
    %716 = vrot.lane.b32.xlu0 %v402, 61
    %v717 = vpop.permute.xlu0 %716
    %720 = vrot.lane.b32.xlu0 %v713, 96
    %v721 = vpop.permute.xlu0 %720
    %722 = vrot.lane.b32.xlu0 %v714, 96
    %v723 = vpop.permute.xlu0 %722
    %v726 = vsel %vm284, %v717, 0
    %728 = vmatprep.subr.mxu0 0.0
    %729 = vmatpush1.msra.mxu0 0.0
    %730 = vmatprep.subr.mxu0 0.0
    %731 = vmatpush1.msra.mxu0 0.0
    %732 = vmatprep.subr.mxu0 0.0
    %733 = vmatpush1.msra.mxu0 0.0
    %734 = vmatprep.subr.mxu0 0.0
    %735 = vmatpush1.msra.mxu0 0.0
    %736 = vmatprep.subr.mxu0 0.0
    %737 = vmatpush1.msra.mxu0 0.0
    %738 = vmatprep.subr.mxu0 0.0
    %739 = vmatpush1.msra.mxu0 0.0
    %740 = vmatprep.subr.mxu0 0.0
    %741 = vmatpush1.msra.mxu0 0.0
    %742 = vmatprep.subr.mxu0 0.0
    %743 = vmatpush1.msra.mxu0 0.0
    %744 = vmatprep.subr.mxu0 0.0
    %745 = vmatpush1.msra.mxu0 0.0
    %746 = vmatprep.subr.mxu0 0.0
    %747 = vmatpush1.msra.mxu0 0.0
    %748 = vmatprep.subr.mxu0 0.0
    %749 = vmatpush1.msra.mxu0 0.0
    %750 = vmatprep.subr.mxu0 0.0
    %751 = vmatpush1.msra.mxu0 0.0
    %752 = vmatprep.subr.mxu0 0.0
    %753 = vmatpush1.msra.mxu0 0.0
    %754 = vmatprep.subr.mxu0 0.0
    %755 = vmatpush1.msra.mxu0 0.0
    %756 = vmatprep.subr.mxu0 0.0
    %757 = vmatpush1.msra.mxu0 %v723
    %758 = vmatprep.subr.mxu0 0.0
    %759 = vmatpush1.msra.mxu0 %v721
    %760 = vmatprep.subr.mxu0 0.0
    %761 = vmatpush2.msra.mxu0 0.0
    %762 = vmatprep.subr.mxu0 0.0
    %763 = vmatpush2.msra.mxu0 0.0
    %764 = vmatprep.subr.mxu0 0.0
    %765 = vmatpush2.msra.mxu0 0.0
    %766 = vmatprep.subr.mxu0 0.0
    %767 = vmatpush2.msra.mxu0 0.0
    %768 = vmatprep.subr.mxu0 0.0
    %769 = vmatpush2.msra.mxu0 0.0
    %770 = vmatprep.subr.mxu0 0.0
    %771 = vmatpush2.msra.mxu0 0.0
    %772 = vmatprep.subr.mxu0 0.0
    %773 = vmatpush2.msra.mxu0 0.0
    %774 = vmatprep.subr.mxu0 0.0
    %775 = vmatpush2.msra.mxu0 0.0
    %776 = vmatprep.subr.mxu0 0.0
    %777 = vmatpush2.msra.mxu0 0.0
    %778 = vmatprep.subr.mxu0 0.0
    %779 = vmatpush2.msra.mxu0 0.0
    %780 = vmatprep.subr.mxu0 0.0
    %781 = vmatpush2.msra.mxu0 0.0
    %782 = vmatprep.subr.mxu0 0.0
    %783 = vmatpush2.msra.mxu0 0.0
    %784 = vmatprep.subr.mxu0 0.0
    %785 = vmatpush2.msra.mxu0 0.0
    %786 = vmatprep.subr.mxu0 0.0
    %787 = vmatpush2.msra.mxu0 0.0
    %788 = vmatprep.subr.mxu0 0.0
    %789 = vmatpush2.msra.mxu0 0.0
    %790 = vmatprep.subr.mxu0 0.0
    %791 = vmatpush2.msra.mxu0 0.0
    %792 = vmatprep.mubr.f32.mxu0 0.0
    %793 = vmatmul.mubr.f32.gmra.mxu0 %v726
    %v794 = vpop.f32.mrf.mxu0
    %v795 = vadd.f32 0.0, %v794
    %v796 = vpop.f32.mrf.mxu0
    %797 = vdwg.mxu0
    %798 = vmatprep.subr.mxu0 0.0
    %799 = vmatpush1.msra.mxu0 0.0
    %800 = vmatprep.subr.mxu0 0.0
    %801 = vmatpush1.msra.mxu0 0.0
    %802 = vmatprep.subr.mxu0 0.0
    %803 = vmatpush1.msra.mxu0 0.0
    %804 = vmatprep.subr.mxu0 0.0
    %805 = vmatpush1.msra.mxu0 0.0
    %806 = vmatprep.subr.mxu0 0.0
    %807 = vmatpush1.msra.mxu0 0.0
    %808 = vmatprep.subr.mxu0 0.0
    %809 = vmatpush1.msra.mxu0 0.0
    %810 = vmatprep.subr.mxu0 0.0
    %811 = vmatpush1.msra.mxu0 0.0
    %812 = vmatprep.subr.mxu0 0.0
    %813 = vmatpush1.msra.mxu0 0.0
    %814 = vmatprep.subr.mxu0 0.0
    %815 = vmatpush1.msra.mxu0 0.0
    %816 = vmatprep.subr.mxu0 0.0
    %817 = vmatpush1.msra.mxu0 0.0
    %818 = vmatprep.subr.mxu0 0.0
    %819 = vmatpush1.msra.mxu0 0.0
    %820 = vmatprep.subr.mxu0 0.0
    %821 = vmatpush1.msra.mxu0 0.0
    %822 = vmatprep.subr.mxu0 0.0
    %823 = vmatpush1.msra.mxu0 0.0
    %824 = vmatprep.subr.mxu0 0.0
    %825 = vmatpush1.msra.mxu0 0.0
    %826 = vmatprep.subr.mxu0 0.0
    %827 = vmatpush1.msra.mxu0 %v692
    %828 = vmatprep.subr.mxu0 0.0
    %829 = vmatpush1.msra.mxu0 %v690
    %830 = vmatprep.subr.mxu0 0.0
    %831 = vmatpush2.msra.mxu0 0.0
    %832 = vmatprep.subr.mxu0 0.0
    %833 = vmatpush2.msra.mxu0 0.0
    %834 = vmatprep.subr.mxu0 0.0
    %835 = vmatpush2.msra.mxu0 0.0
    %836 = vmatprep.subr.mxu0 0.0
    %837 = vmatpush2.msra.mxu0 0.0
    %838 = vmatprep.subr.mxu0 0.0
    %839 = vmatpush2.msra.mxu0 0.0
    %840 = vmatprep.subr.mxu0 0.0
    %841 = vmatpush2.msra.mxu0 0.0
    %842 = vmatprep.subr.mxu0 0.0
    %843 = vmatpush2.msra.mxu0 0.0
    %844 = vmatprep.subr.mxu0 0.0
    %845 = vmatpush2.msra.mxu0 0.0
    %846 = vmatprep.subr.mxu0 0.0
    %847 = vmatpush2.msra.mxu0 0.0
    %848 = vmatprep.subr.mxu0 0.0
    %849 = vmatpush2.msra.mxu0 0.0
    %850 = vmatprep.subr.mxu0 0.0
    %851 = vmatpush2.msra.mxu0 0.0
    %852 = vmatprep.subr.mxu0 0.0
    %853 = vmatpush2.msra.mxu0 0.0
    %854 = vmatprep.subr.mxu0 0.0
    %855 = vmatpush2.msra.mxu0 0.0
    %856 = vmatprep.subr.mxu0 0.0
    %857 = vmatpush2.msra.mxu0 0.0
    %858 = vmatprep.subr.mxu0 0.0
    %859 = vmatpush2.msra.mxu0 0.0
    %860 = vmatprep.subr.mxu0 0.0
    %861 = vmatpush2.msra.mxu0 0.0
    %862 = vmatprep.mubr.f32.mxu0 0.0
    %863 = vmatmul.mubr.f32.gmra.mxu0 %v726
    %v864 = vpop.f32.mrf.mxu0
    %v865 = vadd.f32 0.0, %v864
    %v866 = vpop.f32.mrf.mxu0
    %867 = vdwg.mxu0
    %869 = vset.pattern.permute.xlu0 0
    %870 = vperm.xlu0 %869, %v865
    %v871 = vpop.permute.xlu0 %870
    %v873 = vrcp.pop %v871
    %v874 = vmul.f32 %v795, %v873
    %875 = vmatprep.subr.mxu0 0.0
    %876 = vmatpush1.msra.mxu0 0.0
    %877 = vmatprep.subr.mxu0 0.0
    %878 = vmatpush1.msra.mxu0 0.0
    %879 = vmatprep.subr.mxu0 0.0
    %880 = vmatpush1.msra.mxu0 0.0
    %881 = vmatprep.subr.mxu0 0.0
    %882 = vmatpush1.msra.mxu0 0.0
    %883 = vmatprep.subr.mxu0 0.0
    %884 = vmatpush1.msra.mxu0 0.0
    %885 = vmatprep.subr.mxu0 0.0
    %886 = vmatpush1.msra.mxu0 0.0
    %887 = vmatprep.subr.mxu0 0.0
    %888 = vmatpush1.msra.mxu0 0.0
    %889 = vmatprep.subr.mxu0 0.0
    %890 = vmatpush1.msra.mxu0 0.0
    %891 = vmatprep.subr.mxu0 0.0
    %892 = vmatpush1.msra.mxu0 0.0
    %893 = vmatprep.subr.mxu0 0.0
    %894 = vmatpush1.msra.mxu0 0.0
    %895 = vmatprep.subr.mxu0 0.0
    %896 = vmatpush1.msra.mxu0 0.0
    %897 = vmatprep.subr.mxu0 0.0
    %898 = vmatpush1.msra.mxu0 0.0
    %899 = vmatprep.subr.mxu0 0.0
    %900 = vmatpush1.msra.mxu0 %v399
    %901 = vmatprep.subr.mxu0 0.0
    %902 = vmatpush1.msra.mxu0 %v398
    %903 = vmatprep.subr.mxu0 0.0
    %904 = vmatpush1.msra.mxu0 %v397
    %905 = vmatprep.subr.mxu0 0.0
    %906 = vmatpush1.msra.mxu0 %v396
    %907 = vmatprep.subr.mxu0 0.0
    %908 = vmatpush2.msra.mxu0 0.0
    %909 = vmatprep.subr.mxu0 0.0
    %910 = vmatpush2.msra.mxu0 0.0
    %911 = vmatprep.subr.mxu0 0.0
    %912 = vmatpush2.msra.mxu0 0.0
    %913 = vmatprep.subr.mxu0 0.0
    %914 = vmatpush2.msra.mxu0 0.0
    %915 = vmatprep.subr.mxu0 0.0
    %916 = vmatpush2.msra.mxu0 0.0
    %917 = vmatprep.subr.mxu0 0.0
    %918 = vmatpush2.msra.mxu0 0.0
    %919 = vmatprep.subr.mxu0 0.0
    %920 = vmatpush2.msra.mxu0 0.0
    %921 = vmatprep.subr.mxu0 0.0
    %922 = vmatpush2.msra.mxu0 0.0
    %923 = vmatprep.subr.mxu0 0.0
    %924 = vmatpush2.msra.mxu0 0.0
    %925 = vmatprep.subr.mxu0 0.0
    %926 = vmatpush2.msra.mxu0 0.0
    %927 = vmatprep.subr.mxu0 0.0
    %928 = vmatpush2.msra.mxu0 0.0
    %929 = vmatprep.subr.mxu0 0.0
    %930 = vmatpush2.msra.mxu0 0.0
    %931 = vmatprep.subr.mxu0 0.0
    %932 = vmatpush2.msra.mxu0 0.0
    %933 = vmatprep.subr.mxu0 0.0
    %934 = vmatpush2.msra.mxu0 0.0
    %935 = vmatprep.subr.mxu0 0.0
    %936 = vmatpush2.msra.mxu0 0.0
    %937 = vmatprep.subr.mxu0 0.0
    %938 = vmatpush2.msra.mxu0 0.0
    %939 = vmatprep.mubr.f32.mxu0 0.0
    %940 = vmatmul.mubr.f32.gmra.mxu0 %v432
    %v941 = vpop.f32.mrf.mxu0
    %v942 = vadd.f32 0.0, %v941
    %v943 = vpop.f32.mrf.mxu0
    %944 = vdwg.mxu0
    %v946 = vsel %vm210, %v874, 0
    %948 = vmatprep.subr.mxu0 0.0
    %949 = vmatpush1.msra.mxu0 0.0
    %950 = vmatprep.subr.mxu0 0.0
    %951 = vmatpush1.msra.mxu0 0.0
    %952 = vmatprep.subr.mxu0 0.0
    %953 = vmatpush1.msra.mxu0 0.0
    %954 = vmatprep.subr.mxu0 0.0
    %955 = vmatpush1.msra.mxu0 0.0
    %956 = vmatprep.subr.mxu0 0.0
    %957 = vmatpush1.msra.mxu0 0.0
    %958 = vmatprep.subr.mxu0 0.0
    %959 = vmatpush1.msra.mxu0 0.0
    %960 = vmatprep.subr.mxu0 0.0
    %961 = vmatpush1.msra.mxu0 0.0
    %962 = vmatprep.subr.mxu0 0.0
    %963 = vmatpush1.msra.mxu0 0.0
    %964 = vmatprep.subr.mxu0 0.0
    %965 = vmatpush1.msra.mxu0 0.0
    %966 = vmatprep.subr.mxu0 0.0
    %967 = vmatpush1.msra.mxu0 0.0
    %968 = vmatprep.subr.mxu0 0.0
    %969 = vmatpush1.msra.mxu0 0.0
    %970 = vmatprep.subr.mxu0 0.0
    %971 = vmatpush1.msra.mxu0 0.0
    %972 = vmatprep.subr.mxu0 0.0
    %973 = vmatpush1.msra.mxu0 %v395
    %974 = vmatprep.subr.mxu0 0.0
    %975 = vmatpush1.msra.mxu0 %v394
    %976 = vmatprep.subr.mxu0 0.0
    %977 = vmatpush1.msra.mxu0 %v393
    %978 = vmatprep.subr.mxu0 0.0
    %979 = vmatpush1.msra.mxu0 %v392
    %980 = vmatprep.subr.mxu0 0.0
    %981 = vmatpush2.msra.mxu0 0.0
    %982 = vmatprep.subr.mxu0 0.0
    %983 = vmatpush2.msra.mxu0 0.0
    %984 = vmatprep.subr.mxu0 0.0
    %985 = vmatpush2.msra.mxu0 0.0
    %986 = vmatprep.subr.mxu0 0.0
    %987 = vmatpush2.msra.mxu0 0.0
    %988 = vmatprep.subr.mxu0 0.0
    %989 = vmatpush2.msra.mxu0 0.0
    %990 = vmatprep.subr.mxu0 0.0
    %991 = vmatpush2.msra.mxu0 0.0
    %992 = vmatprep.subr.mxu0 0.0
    %993 = vmatpush2.msra.mxu0 0.0
    %994 = vmatprep.subr.mxu0 0.0
    %995 = vmatpush2.msra.mxu0 0.0
    %996 = vmatprep.subr.mxu0 0.0
    %997 = vmatpush2.msra.mxu0 0.0
    %998 = vmatprep.subr.mxu0 0.0
    %999 = vmatpush2.msra.mxu0 0.0
    %1000 = vmatprep.subr.mxu0 0.0
    %1001 = vmatpush2.msra.mxu0 0.0
    %1002 = vmatprep.subr.mxu0 0.0
    %1003 = vmatpush2.msra.mxu0 0.0
    %1004 = vmatprep.subr.mxu0 0.0
    %1005 = vmatpush2.msra.mxu0 0.0
    %1006 = vmatprep.subr.mxu0 0.0
    %1007 = vmatpush2.msra.mxu0 0.0
    %1008 = vmatprep.subr.mxu0 0.0
    %1009 = vmatpush2.msra.mxu0 0.0
    %1010 = vmatprep.subr.mxu0 0.0
    %1011 = vmatpush2.msra.mxu0 0.0
    %1012 = vmatprep.mubr.f32.mxu0 0.0
    %1013 = vmatmul.mubr.f32.gmra.mxu0 %v946
    %v1014 = vpop.f32.mrf.mxu0
    %v1015 = vadd.f32 %v942, %v1014
    %v1016 = vpop.f32.mrf.mxu0
    %1017 = vdwg.mxu0
    %v1018 = vlaneseq
    %v1019 = vshrl.u32 %v1018, 7
    %v1020 = vsub.s32 0, %v1019
    %v1021 = vrot.slane %v401, %v1020
    %1023 = vrot.lane.b32.xlu0 %v1021, 96
    %v1024 = vpop.permute.xlu0 %1023
    %v1026 = vadd.f32 %v1015, %v1024
    %v1027 = vtanh.pop %v1026
    %vm1028 = vcmask 254976
    %1029 = vst.msk [vmem:[#allocation13] sm:$0x3] %vm1028, %v1027
    %1031 = vst.msk [vmem:[#allocation14] sm:$0x3] %vm1028, %v411
    %1033 = vrot.lane.b32.xlu0 %v385, 96
    %v1034 = vpop.permute.xlu0 %1033
    %1036 = vst.msk [vmem:[#allocation16] sm:$0x3] %vm1028, %v1034
    // Predicated region
    $region54: #{decoder_forward.1} parent=1 // pred_check
      _
    $region55: #{decoder_forward.1} parent=1 // pred_check_branch
      %1038 = sbr.rel (0) target = $region57
    $region56: #{decoder_forward.1} parent=1 // pred_region
      %s1040 = ssub.s32 32, 32
      %1041 = vsyncadd [#allocation4], %s1040
      %s1043 = sshll.u32 [#allocation13], 4
      %s1044 = int_to_ptr.vmem [resolvable:$true] %s1043
      %1046 = dma.vmem_to_hbm [thread:$0]  %s1044, 32, %s7, [#allocation4]
    $region57: #{decoder_forward.1} parent=1 // pred_fallthru
      _
    // Predicated region
    $region58: #{decoder_forward.1} parent=1 // pred_check
      _
    $region59: #{decoder_forward.1} parent=1 // pred_check_branch
      %1048 = sbr.rel (0) target = $region61
    $region60: #{decoder_forward.1} parent=1 // pred_region
      %s1050 = ssub.s32 32, 32
      %1051 = vsyncadd [#allocation15], %s1050
      %s1053 = sshll.u32 [#allocation14], 4
      %s1054 = int_to_ptr.vmem [resolvable:$true] %s1053
      %1056 = dma.vmem_to_hbm [thread:$0]  %s1054, 32, %s8, [#allocation15]
    $region61: #{decoder_forward.1} parent=1 // pred_fallthru
      _
    // Predicated region
    $region62: #{decoder_forward.1} parent=1 // pred_check
      _
    $region63: #{decoder_forward.1} parent=1 // pred_check_branch
      %1058 = sbr.rel (0) target = $region65
    $region64: #{decoder_forward.1} parent=1 // pred_region
      %s1060 = ssub.s32 32, 32
      %1061 = vsyncadd [#allocation15], %s1060
      %s1063 = sshll.u32 [#allocation16], 4
      %s1064 = int_to_ptr.vmem [resolvable:$true] %s1063
      %1066 = dma.vmem_to_hbm [thread:$0]  %s1064, 32, %s9, [#allocation15]
    $region65: #{decoder_forward.1} parent=1 // pred_fallthru
      _
    // Predicated region
    $region66: #{decoder_forward.1} parent=1 // pred_check
      _
    $region67: #{decoder_forward.1} parent=1 // pred_check_branch
      %1068 = sbr.rel (0) target = $region69
    $region68: #{decoder_forward.1} parent=1 // pred_region
      %1069 = dma.done [#allocation4], 32
    $region69: #{decoder_forward.1} parent=1 // pred_fallthru
      _
    // Predicated region
    $region70: #{decoder_forward.1} parent=1 // pred_check
      _
    $region71: #{decoder_forward.1} parent=1 // pred_check_branch
      %1071 = sbr.rel (0) target = $region73
    $region72: #{decoder_forward.1} parent=1 // pred_region
      %1072 = dma.done [#allocation15], 32
    $region73: #{decoder_forward.1} parent=1 // pred_fallthru
      _
    // Predicated region
    $region74: #{decoder_forward.1} parent=1 // pred_check
      _
    $region75: #{decoder_forward.1} parent=1 // pred_check_branch
      %1074 = sbr.rel (0) target = $region77
    $region76: #{decoder_forward.1} parent=1 // pred_region
      %1075 = dma.done [#allocation15], 32
    $region77: #{decoder_forward.1} parent=1 // pred_fallthru
      _
    %1076 = vsyncpa [#allocation3], 1
    %1077 = vsyncpa [#allocation8], 1
    %1078 = vsyncpa [#allocation11], 1
    %1079 = vsyncpa [#allocation4], 1
    %1080 = vsyncpa [#allocation15], 1
    %1081 = vsyncpa [#allocation5], 1

</llo_original>
